<compile_context>
chip_gen: v7x
topology: tpu7x:2x2x1
jax: 0.10.0
libtpu: 0.0.40
codegen_flags: <defaults>
</compile_context>

<pallas_src>
import functools

import jax
import jax.numpy as jnp
from jax.experimental import pallas as pl
from jax.experimental.pallas import tpu as pltpu


# TPU-native half precision for the converted network.
HALF_DTYPE = jnp.bfloat16
BN_EPS = 1e-5


def _fp16_net_kernel(x_ref, w1_ref, scale_ref, shift_ref, w2_ref, b2_ref,
                     o_ref):
    # FP16Model.forward: inputs = tuple(t.half() ...) — done in-kernel so x is
    # read from HBM exactly once (no separate wrapper cast pass).
    x = x_ref[...].astype(HALF_DTYPE)

    # Linear 1: bf16 params & input straight into the MXU, fp32 accumulate.
    h = jnp.dot(x, w1_ref[...], preferred_element_type=jnp.float32)

    # Folded eval-mode BatchNorm (+ the Linear-1 bias, folded into shift) in
    # fp32, then ReLU. No intermediate 16-bit round trips.
    # (Optionally scale could be folded into w1 in the wrapper; kept here to
    #  preserve the original module's bf16 weight values exactly.)
    h = h * scale_ref[...] + shift_ref[...]
    h = jnp.maximum(h, jnp.float32(0.0))

    # Single cast to 16-bit at the second matmul boundary.
    r = h.astype(HALF_DTYPE)

    # Linear 2: bf16 operands, fp32 accumulate; b2 already fp32.
    out = jnp.dot(r, w2_ref[...], preferred_element_type=jnp.float32)
    out = out + b2_ref[...]
    o_ref[...] = out.astype(o_ref.dtype)


def _vmem_budget_bytes(tb, d_in, h, d_out):
    """Conservative double-buffered VMEM estimate for one grid step."""
    half = jnp.dtype(HALF_DTYPE).itemsize
    f32 = 4
    est = (
        2 * tb * d_in * f32          # x tile (double-buffered)
        + 2 * tb * d_out * half      # out tile
        + 2 * (d_in * h + h * d_out) * half   # w1, w2 (replicated blocks)
        + 2 * (2 * h + d_out) * f32  # scale, shift, b2
        + tb * h * f32               # fp32 intermediate activation
    )
    # 1.5x headroom, clamped to [16 MiB, 64 MiB] (v7x physical per-TC VMEM).
    return int(min(max(int(est * 1.5), 16 * 2**20), 64 * 2**20))


def fp16_model_forward(x, params, *, block_b=512):
    """FP16Model.forward: cast inputs to half, run the converted network."""
    w1, b1, gamma, beta, rmean, rvar, w2, b2 = params
    B, D_in = x.shape
    H = w1.shape[1]
    D_out = w2.shape[1]

    # Eval-mode BN is constant algebra: fold once, outside the hot path.
    # The BN module was exempted from conversion, so this stays fp32.
    # b1 (half param of Linear-1) is folded into the shift (exact in fp32):
    #   BN(x@w1 + b1) = scale*(x@w1) + (scale*b1 + beta - rmean*scale)
    scale = (gamma * jax.lax.rsqrt(rvar + jnp.float32(BN_EPS))).astype(jnp.float32)
    shift = (b1.astype(jnp.float32) * scale
             + beta - rmean * scale).astype(jnp.float32)
    # Cast b2 to fp32 once here instead of every grid step in-kernel.
    b2_f32 = b2.astype(jnp.float32)

    # Tile selection: large tiles for the mem-bound streaming regime; tiny
    # batches collapse to a single block.
    tb = min(block_b, B)
    grid = (pl.cdiv(B, tb),)

    in_specs = [
        pl.BlockSpec((tb, D_in), lambda i: (i, 0)),    # x (f32 in HBM, cast in-kernel)
        pl.BlockSpec((D_in, H), lambda i: (0, 0)),     # w1 (half, replicated)
        pl.BlockSpec((1, H), lambda i: (0, 0)),        # folded BN scale (fp32)
        pl.BlockSpec((1, H), lambda i: (0, 0)),        # folded BN shift + b1 (fp32)
        pl.BlockSpec((H, D_out), lambda i: (0, 0)),    # w2 (half, replicated)
        pl.BlockSpec((1, D_out), lambda i: (0, 0)),    # b2 (fp32, replicated)
    ]

    half_bytes = jnp.dtype(HALF_DTYPE).itemsize
    cost = pl.CostEstimate(
        flops=2 * B * D_in * H + 2 * B * H * D_out + 4 * B * H + 2 * B * D_out,
        transcendentals=0,
        bytes_accessed=(B * D_in * 4 + D_in * H * half_bytes
                        + 2 * H * 4 + H * D_out * half_bytes
                        + D_out * 4 + B * D_out * half_bytes),
    )

    out = pl.pallas_call(
        _fp16_net_kernel,
        out_shape=jax.ShapeDtypeStruct((B, D_out), HALF_DTYPE),
        grid=grid,
        in_specs=in_specs,
        out_specs=pl.BlockSpec((tb, D_out), lambda i: (i, 0)),
        compiler_params=pltpu.CompilerParams(
            dimension_semantics=("parallel",),   # batch sharded across v7x's 2 TCs
            vmem_limit_bytes=_vmem_budget_bytes(tb, D_in, H, D_out)),
        cost_estimate=cost,
    )(x, w1, scale, shift, w2, b2_f32)
    return out


def init_params(key, d_in, hidden, d_out):
    """PyTorch-default-style init, then convert_network(half) semantics."""
    k1, k2, k3, k4 = jax.random.split(key, 4)
    bound1 = 1.0 / jnp.sqrt(d_in)
    bound2 = 1.0 / jnp.sqrt(hidden)
    # Linear layers -> converted to half by convert_network
    w1 = jax.random.uniform(k1, (d_in, hidden), jnp.float32, -bound1, bound1).astype(HALF_DTYPE)
    b1 = jax.random.uniform(k2, (1, hidden), jnp.float32, -bound1, bound1).astype(HALF_DTYPE)
    w2 = jax.random.uniform(k3, (hidden, d_out), jnp.float32, -bound2, bound2).astype(HALF_DTYPE)
    b2 = jax.random.uniform(k4, (1, d_out), jnp.float32, -bound2, bound2).astype(HALF_DTYPE)
    # Affine BatchNorm module is skipped by convert_network -> stays fp32
    gamma = jnp.ones((1, hidden), jnp.float32)
    beta = jnp.zeros((1, hidden), jnp.float32)
    rmean = jnp.zeros((1, hidden), jnp.float32)
    rvar = jnp.ones((1, hidden), jnp.float32)
    return (w1, b1, gamma, beta, rmean, rvar, w2, b2)


def reference_forward(x, params):
    """Pure-JAX reference in the original (unfolded) operation order."""
    w1, b1, gamma, beta, rmean, rvar, w2, b2 = params
    x_h = x.astype(HALF_DTYPE)
    h = jnp.dot(x_h, w1, preferred_element_type=jnp.float32) + b1.astype(jnp.float32)
    scale = gamma * jax.lax.rsqrt(rvar + jnp.float32(BN_EPS))
    shift = beta - rmean * scale
    h = h * scale + shift
    r = jnp.maximum(h, 0.0).astype(HALF_DTYPE)
    out = jnp.dot(r, w2, preferred_element_type=jnp.float32) + b2.astype(jnp.float32)
    return out.astype(HALF_DTYPE)


if __name__ == "__main__":
    # Lane-dense (multiples of 128) feature dims; demo batch is a single block.
    B, D_IN, HIDDEN, D_OUT = 256, 128, 256, 128

    key = jax.random.PRNGKey(0)
    kx, kp = jax.random.split(key)
    x = jax.random.normal(kx, (B, D_IN), dtype=jnp.float32)
    params = init_params(kp, D_IN, HIDDEN, D_OUT)

    # jit the whole forward so the BN/bias fold is compiled & fused once.
    fwd = jax.jit(functools.partial(fp16_model_forward, block_b=512))
    out = fwd(x, params)
    out = jax.block_until_ready(out)

    ref = reference_forward(x, params)
    assert out.shape == (B, D_OUT) and out.dtype == HALF_DTYPE
    assert jnp.allclose(out.astype(jnp.float32), ref.astype(jnp.float32),
                        rtol=2e-2, atol=2e-2)

    print("KERNEL_OK")
</pallas_src>

<mosaic_0001>
module attributes {stable_mosaic.version = 11 : i64} {
  func.func @_fp16_net_kernel(%arg0: i32, %arg1: memref<256x128xf32, #tpu.memory_space<vmem>>, %arg2: memref<128x256xbf16, #tpu.memory_space<vmem>>, %arg3: memref<1x256xf32, #tpu.memory_space<vmem>>, %arg4: memref<1x256xf32, #tpu.memory_space<vmem>>, %arg5: memref<256x128xbf16, #tpu.memory_space<vmem>>, %arg6: memref<1x128xf32, #tpu.memory_space<vmem>>, %arg7: memref<256x128xbf16, #tpu.memory_space<vmem>>) attributes {dimension_semantics = [#tpu.dimension_semantics<parallel>], iteration_bounds = array<i64: 1>, scalar_prefetch = 0 : i64, scratch_operands = 0 : i64, tpu.core_type = #tpu.core_type<tc>, window_params = [{transform_indices = @transform_0, window_bounds = array<i64: 256, 128>}, {pipeline_mode = #tpu.pipeline_mode<synchronous>, transform_indices = @transform_1, window_bounds = array<i64: 128, 256>}, {pipeline_mode = #tpu.pipeline_mode<synchronous>, transform_indices = @transform_2, window_bounds = array<i64: 1, 256>}, {pipeline_mode = #tpu.pipeline_mode<synchronous>, transform_indices = @transform_3, window_bounds = array<i64: 1, 256>}, {pipeline_mode = #tpu.pipeline_mode<synchronous>, transform_indices = @transform_4, window_bounds = array<i64: 256, 128>}, {pipeline_mode = #tpu.pipeline_mode<synchronous>, transform_indices = @transform_5, window_bounds = array<i64: 1, 128>}, {transform_indices = @transform_6, window_bounds = array<i64: 256, 128>}]} {
    %c0 = arith.constant 0 : index
    %c0_0 = arith.constant 0 : index
    %0 = vector.load %arg1[%c0, %c0_0] : memref<256x128xf32, #tpu.memory_space<vmem>>, vector<256x128xf32>
    %1 = arith.truncf %0 : vector<256x128xf32> to vector<256x128xbf16>
    %c0_1 = arith.constant 0 : index
    %c0_2 = arith.constant 0 : index
    %2 = vector.load %arg2[%c0_1, %c0_2] : memref<128x256xbf16, #tpu.memory_space<vmem>>, vector<128x256xbf16>
    %cst = arith.constant dense<0.000000e+00> : vector<256x256xf32>
    %3 = tpu.matmul %1, %2, %cst {dimension_numbers = #tpu.dot_dimension_numbers<[1], [0], [0], [1], [0, 0, 1, 1], [], []>} : vector<256x128xbf16>, vector<128x256xbf16>, vector<256x256xf32> -> vector<256x256xf32>
    %c0_3 = arith.constant 0 : index
    %c0_4 = arith.constant 0 : index
    %4 = vector.load %arg3[%c0_3, %c0_4] : memref<1x256xf32, #tpu.memory_space<vmem>>, vector<1x256xf32>
    %5 = vector.broadcast %4 : vector<1x256xf32> to vector<256x256xf32>
    %6 = arith.mulf %3, %5 : vector<256x256xf32>
    %c0_5 = arith.constant 0 : index
    %c0_6 = arith.constant 0 : index
    %7 = vector.load %arg4[%c0_5, %c0_6] : memref<1x256xf32, #tpu.memory_space<vmem>>, vector<1x256xf32>
    %8 = vector.broadcast %7 : vector<1x256xf32> to vector<256x256xf32>
    %9 = arith.addf %6, %8 : vector<256x256xf32>
    %cst_7 = arith.constant 0.000000e+00 : f32
    %10 = vector.broadcast %cst_7 : f32 to vector<256x256xf32>
    %11 = arith.maximumf %9, %10 : vector<256x256xf32>
    %12 = arith.truncf %11 : vector<256x256xf32> to vector<256x256xbf16>
    %c0_8 = arith.constant 0 : index
    %c0_9 = arith.constant 0 : index
    %13 = vector.load %arg5[%c0_8, %c0_9] : memref<256x128xbf16, #tpu.memory_space<vmem>>, vector<256x128xbf16>
    %cst_10 = arith.constant dense<0.000000e+00> : vector<256x128xf32>
    %14 = tpu.matmul %12, %13, %cst_10 {dimension_numbers = #tpu.dot_dimension_numbers<[1], [0], [0], [1], [0, 0, 1, 1], [], []>} : vector<256x256xbf16>, vector<256x128xbf16>, vector<256x128xf32> -> vector<256x128xf32>
    %c0_11 = arith.constant 0 : index
    %c0_12 = arith.constant 0 : index
    %15 = vector.load %arg6[%c0_11, %c0_12] : memref<1x128xf32, #tpu.memory_space<vmem>>, vector<1x128xf32>
    %16 = vector.broadcast %15 : vector<1x128xf32> to vector<256x128xf32>
    %17 = arith.addf %14, %16 : vector<256x128xf32>
    %18 = arith.truncf %17 : vector<256x128xf32> to vector<256x128xbf16>
    %c0_13 = arith.constant 0 : index
    %c0_14 = arith.constant 0 : index
    %19 = vector.load %arg7[%c0_13, %c0_14] : memref<256x128xbf16, #tpu.memory_space<vmem>>, vector<256x128xbf16>
    tpu.vector_store %arg7[%c0_13, %c0_14], %18 {strides = array<i32>} : memref<256x128xbf16, #tpu.memory_space<vmem>>, vector<256x128xbf16>,
    return
  }
  func.func @transform_0(%arg0: i32) -> (i32, i32) {
    %c0_i32 = arith.constant 0 : i32
    %c0_i32_0 = arith.constant 0 : i32
    return %arg0, %c0_i32 : i32, i32
  }
  func.func @transform_1(%arg0: i32) -> (i32, i32) {
    %c0_i32 = arith.constant 0 : i32
    %c0_i32_0 = arith.constant 0 : i32
    %c0_i32_1 = arith.constant 0 : i32
    return %c0_i32, %c0_i32_0 : i32, i32
  }
  func.func @transform_2(%arg0: i32) -> (i32, i32) {
    %c0_i32 = arith.constant 0 : i32
    %c0_i32_0 = arith.constant 0 : i32
    %c0_i32_1 = arith.constant 0 : i32
    return %c0_i32, %c0_i32_0 : i32, i32
  }
  func.func @transform_3(%arg0: i32) -> (i32, i32) {
    %c0_i32 = arith.constant 0 : i32
    %c0_i32_0 = arith.constant 0 : i32
    %c0_i32_1 = arith.constant 0 : i32
    return %c0_i32, %c0_i32_0 : i32, i32
  }
  func.func @transform_4(%arg0: i32) -> (i32, i32) {
    %c0_i32 = arith.constant 0 : i32
    %c0_i32_0 = arith.constant 0 : i32
    %c0_i32_1 = arith.constant 0 : i32
    return %c0_i32, %c0_i32_0 : i32, i32
  }
  func.func @transform_5(%arg0: i32) -> (i32, i32) {
    %c0_i32 = arith.constant 0 : i32
    %c0_i32_0 = arith.constant 0 : i32
    %c0_i32_1 = arith.constant 0 : i32
    return %c0_i32, %c0_i32_0 : i32, i32
  }
  func.func @transform_6(%arg0: i32) -> (i32, i32) {
    %c0_i32 = arith.constant 0 : i32
    %c0_i32_0 = arith.constant 0 : i32
    return %arg0, %c0_i32 : i32, i32
  }
}

</mosaic_0001>

<llo_original>
// kernel: fp16_model_forward.1
$region0: #{fp16_model_forward.1}
  #allocation0 [shape = 'u32[]', space=smem, size = 0x4, offset = 0x4, fixed_abs, tag = 'smem constant byte address 0x4 - core index']
  #allocation1 [shape = 'u32[144,128]{1,0:T(1,128)}', space=vmem, size = 0x12000, scoped, tag = 'internal scratch']
  %s0 = inlined_call_operand.hbm [shape: f32[256,128], index: 0, kind: input, shape index: {}]
  %s1 = inlined_call_operand.hbm [shape: bf16[128,256], index: 1, kind: input, shape index: {}]
  %s2 = inlined_call_operand.vmem [shape: f32[1,256], index: 2, kind: input, shape index: {}]
  %s3 = inlined_call_operand.vmem [shape: f32[1,256], index: 3, kind: input, shape index: {}]
  %s4 = inlined_call_operand.hbm [shape: bf16[256,128], index: 4, kind: input, shape index: {}]
  %s5 = inlined_call_operand.vmem [shape: f32[1,128], index: 5, kind: input, shape index: {}]
  %s6 = inlined_call_operand.hbm [shape: bf16[256,128], index: 6, kind: output, shape index: {}]
  %s7 = sld [smem:[#allocation0]]
  $region46: #{fp16_model_forward.1} parent=0
    _
  %s9 = ssub.s32 1, %s7
  %s10 = scalar_select 0, %s9, %s7
  $region1: #{fp16_model_forward.1} parent=0
    #allocation2 [shape = 'u8[131072]{0}', space=vmem, size = 0x20000, scoped, tag = 'input window, operand 0, single buffered']
    #allocation3 [shape = 's32[1]{0}', space=sflag, size = 0x4, scoped, tag = 'scoped memory for fp16_model_forward.1']
    #allocation4 [shape = 's32[1]{0}', space=sflag, size = 0x4, scoped, tag = 'scoped memory for fp16_model_forward.1']
    #allocation5 [shape = 'u8[65536]{0}', space=vmem, size = 0x10000, scoped, tag = 'input window, operand 1, single buffered']
    #allocation6 [shape = 's32[1]{0}', space=sflag, size = 0x4, scoped, tag = 'scoped memory for fp16_model_forward.1']
    #allocation7 [shape = 'u8[65536]{0}', space=vmem, size = 0x10000, scoped, tag = 'input window, operand 4, single buffered']
    #allocation8 [shape = 'u8[65536]{0}', space=vmem, size = 0x10000, scoped, tag = 'output window, operand 0, single buffered']
    %11 = vsyncpa [#allocation3], 0
    %12 = vsyncpa [#allocation6], 0
    %13 = vsyncpa [#allocation4], 0
    // Predicated region
    $region2: #{fp16_model_forward.1} parent=1 // pred_check
      _
    $region3: #{fp16_model_forward.1} parent=1 // pred_check_branch
      %15 = sbr.rel (0) target = $region5
    $region4: #{fp16_model_forward.1} parent=1 // pred_region
      %s17 = ssub.s32 4096, 4096
      %18 = vsyncadd [#allocation3], %s17
      %s19 = sshll.u32 [#allocation2], 4
      %s20 = int_to_ptr.vmem [resolvable:$true] %s19
      %25 = dma.hbm_to_vmem [thread:$0]  %s0, 4096, %s20, [#allocation3], 128, 128, 8
    $region5: #{fp16_model_forward.1} parent=1 // pred_fallthru
      _
    // Predicated region
    $region6: #{fp16_model_forward.1} parent=1 // pred_check
      _
    $region7: #{fp16_model_forward.1} parent=1 // pred_check_branch
      %27 = sbr.rel (0) target = $region9
    $region8: #{fp16_model_forward.1} parent=1 // pred_region
      %s29 = ssub.s32 2048, 2048
      %30 = vsyncadd [#allocation6], %s29
      %s31 = sshll.u32 [#allocation5], 4
      %s32 = int_to_ptr.vmem [resolvable:$true] %s31
      %37 = dma.hbm_to_vmem [thread:$0]  %s1, 2048, %s32, [#allocation6], 128, 128, 8
    $region9: #{fp16_model_forward.1} parent=1 // pred_fallthru
      _
    // Predicated region
    $region10: #{fp16_model_forward.1} parent=1 // pred_check
      _
    $region11: #{fp16_model_forward.1} parent=1 // pred_check_branch
      %39 = sbr.rel (0) target = $region13
    $region12: #{fp16_model_forward.1} parent=1 // pred_region
      _
    $region13: #{fp16_model_forward.1} parent=1 // pred_fallthru
      _
    // Predicated region
    $region14: #{fp16_model_forward.1} parent=1 // pred_check
      _
    $region15: #{fp16_model_forward.1} parent=1 // pred_check_branch
      %41 = sbr.rel (0) target = $region17
    $region16: #{fp16_model_forward.1} parent=1 // pred_region
      _
    $region17: #{fp16_model_forward.1} parent=1 // pred_fallthru
      _
    // Predicated region
    $region18: #{fp16_model_forward.1} parent=1 // pred_check
      _
    $region19: #{fp16_model_forward.1} parent=1 // pred_check_branch
      %43 = sbr.rel (0) target = $region21
    $region20: #{fp16_model_forward.1} parent=1 // pred_region
      %s45 = ssub.s32 2048, 2048
      %46 = vsyncadd [#allocation6], %s45
      %s47 = sshll.u32 [#allocation7], 4
      %s48 = int_to_ptr.vmem [resolvable:$true] %s47
      %53 = dma.hbm_to_vmem [thread:$0]  %s4, 2048, %s48, [#allocation6], 64, 64, 4
    $region21: #{fp16_model_forward.1} parent=1 // pred_fallthru
      _
    // Predicated region
    $region22: #{fp16_model_forward.1} parent=1 // pred_check
      _
    $region23: #{fp16_model_forward.1} parent=1 // pred_check_branch
      %55 = sbr.rel (0) target = $region25
    $region24: #{fp16_model_forward.1} parent=1 // pred_region
      _
    $region25: #{fp16_model_forward.1} parent=1 // pred_fallthru
      _
    // Predicated region
    $region26: #{fp16_model_forward.1} parent=1 // pred_check
      _
    $region27: #{fp16_model_forward.1} parent=1 // pred_check_branch
      %57 = sbr.rel (0) target = $region29
    $region28: #{fp16_model_forward.1} parent=1 // pred_region
      %58 = dma.done [#allocation3], 4096
    $region29: #{fp16_model_forward.1} parent=1 // pred_fallthru
      _
    // Predicated region
    $region30: #{fp16_model_forward.1} parent=1 // pred_check
      _
    $region31: #{fp16_model_forward.1} parent=1 // pred_check_branch
      %60 = sbr.rel (0) target = $region33
    $region32: #{fp16_model_forward.1} parent=1 // pred_region
      %61 = dma.done [#allocation6], 2048
    $region33: #{fp16_model_forward.1} parent=1 // pred_fallthru
      _
    // Predicated region
    $region34: #{fp16_model_forward.1} parent=1 // pred_check
      _
    $region35: #{fp16_model_forward.1} parent=1 // pred_check_branch
      %63 = sbr.rel (0) target = $region37
    $region36: #{fp16_model_forward.1} parent=1 // pred_region
      %64 = dma.done [#allocation6], 2048
    $region37: #{fp16_model_forward.1} parent=1 // pred_fallthru
      _
    %v66 = vld [vmem:[#allocation2] sm:$0xff]
    %v67 = vld [vmem:[#allocation2 + $0x8] sm:$0xff]
    %v68 = vld [vmem:[#allocation2 + $0x10] sm:$0xff]
    %v69 = vld [vmem:[#allocation2 + $0x18] sm:$0xff]
    %v70 = vld [vmem:[#allocation2 + $0x20] sm:$0xff]
    %v71 = vld [vmem:[#allocation2 + $0x28] sm:$0xff]
    %v72 = vld [vmem:[#allocation2 + $0x30] sm:$0xff]
    %v73 = vld [vmem:[#allocation2 + $0x38] sm:$0xff]
    %v74 = vld [vmem:[#allocation2 + $0x40] sm:$0xff]
    %v75 = vld [vmem:[#allocation2 + $0x48] sm:$0xff]
    %v76 = vld [vmem:[#allocation2 + $0x50] sm:$0xff]
    %v77 = vld [vmem:[#allocation2 + $0x58] sm:$0xff]
    %v78 = vld [vmem:[#allocation2 + $0x60] sm:$0xff]
    %v79 = vld [vmem:[#allocation2 + $0x68] sm:$0xff]
    %v80 = vld [vmem:[#allocation2 + $0x70] sm:$0xff]
    %v81 = vld [vmem:[#allocation2 + $0x78] sm:$0xff]
    %v82 = vld [vmem:[#allocation2 + $0x80] sm:$0xff]
    %v83 = vld [vmem:[#allocation2 + $0x88] sm:$0xff]
    %v84 = vld [vmem:[#allocation2 + $0x90] sm:$0xff]
    %v85 = vld [vmem:[#allocation2 + $0x98] sm:$0xff]
    %v86 = vld [vmem:[#allocation2 + $0xa0] sm:$0xff]
    %v87 = vld [vmem:[#allocation2 + $0xa8] sm:$0xff]
    %v88 = vld [vmem:[#allocation2 + $0xb0] sm:$0xff]
    %v89 = vld [vmem:[#allocation2 + $0xb8] sm:$0xff]
    %v90 = vld [vmem:[#allocation2 + $0xc0] sm:$0xff]
    %v91 = vld [vmem:[#allocation2 + $0xc8] sm:$0xff]
    %v92 = vld [vmem:[#allocation2 + $0xd0] sm:$0xff]
    %v93 = vld [vmem:[#allocation2 + $0xd8] sm:$0xff]
    %v94 = vld [vmem:[#allocation2 + $0xe0] sm:$0xff]
    %v95 = vld [vmem:[#allocation2 + $0xe8] sm:$0xff]
    %v96 = vld [vmem:[#allocation2 + $0xf0] sm:$0xff]
    %v97 = vld [vmem:[#allocation2 + $0xf8] sm:$0xff]
    %v98 = vpack.c.bf16 %v67, %v66
    %v99 = vpack.c.bf16 %v69, %v68
    %v100 = vpack.c.bf16 %v71, %v70
    %v101 = vpack.c.bf16 %v73, %v72
    %v102 = vpack.c.bf16 %v75, %v74
    %v103 = vpack.c.bf16 %v77, %v76
    %v104 = vpack.c.bf16 %v79, %v78
    %v105 = vpack.c.bf16 %v81, %v80
    %v106 = vpack.c.bf16 %v83, %v82
    %v107 = vpack.c.bf16 %v85, %v84
    %v108 = vpack.c.bf16 %v87, %v86
    %v109 = vpack.c.bf16 %v89, %v88
    %v110 = vpack.c.bf16 %v91, %v90
    %v111 = vpack.c.bf16 %v93, %v92
    %v112 = vpack.c.bf16 %v95, %v94
    %v113 = vpack.c.bf16 %v97, %v96
    %v114 = vld [vmem:[#allocation5] sm:$0xff]
    %v115 = vld [vmem:[#allocation5 + $0x8] sm:$0xff]
    %v116 = vld [vmem:[#allocation5 + $0x10] sm:$0xff]
    %v117 = vld [vmem:[#allocation5 + $0x18] sm:$0xff]
    %v118 = vld [vmem:[#allocation5 + $0x20] sm:$0xff]
    %v119 = vld [vmem:[#allocation5 + $0x28] sm:$0xff]
    %v120 = vld [vmem:[#allocation5 + $0x30] sm:$0xff]
    %v121 = vld [vmem:[#allocation5 + $0x38] sm:$0xff]
    %v122 = vld [vmem:[#allocation5 + $0x40] sm:$0xff]
    %v123 = vld [vmem:[#allocation5 + $0x48] sm:$0xff]
    %v124 = vld [vmem:[#allocation5 + $0x50] sm:$0xff]
    %v125 = vld [vmem:[#allocation5 + $0x58] sm:$0xff]
    %v126 = vld [vmem:[#allocation5 + $0x60] sm:$0xff]
    %v127 = vld [vmem:[#allocation5 + $0x68] sm:$0xff]
    %v128 = vld [vmem:[#allocation5 + $0x70] sm:$0xff]
    %v129 = vld [vmem:[#allocation5 + $0x78] sm:$0xff]
    %v146 = vunpack.c.l.b16 %v114
    %v147 = vunpack.c.h.b16 %v114
    %v148 = vunpack.c.l.b16 %v115
    %v149 = vunpack.c.h.b16 %v115
    %v150 = vunpack.c.l.b16 %v116
    %v151 = vunpack.c.h.b16 %v116
    %v152 = vunpack.c.l.b16 %v117
    %v153 = vunpack.c.h.b16 %v117
    %v154 = vunpack.c.l.b16 %v118
    %v155 = vunpack.c.h.b16 %v118
    %v156 = vunpack.c.l.b16 %v119
    %v157 = vunpack.c.h.b16 %v119
    %v158 = vunpack.c.l.b16 %v120
    %v159 = vunpack.c.h.b16 %v120
    %v160 = vunpack.c.l.b16 %v121
    %v161 = vunpack.c.h.b16 %v121
    %v162 = vunpack.c.l.b16 %v122
    %v163 = vunpack.c.h.b16 %v122
    %v164 = vunpack.c.l.b16 %v123
    %v165 = vunpack.c.h.b16 %v123
    %v166 = vunpack.c.l.b16 %v124
    %v167 = vunpack.c.h.b16 %v124
    %v168 = vunpack.c.l.b16 %v125
    %v169 = vunpack.c.h.b16 %v125
    %v170 = vunpack.c.l.b16 %v126
    %v171 = vunpack.c.h.b16 %v126
    %v172 = vunpack.c.l.b16 %v127
    %v173 = vunpack.c.h.b16 %v127
    %v174 = vunpack.c.l.b16 %v128
    %v175 = vunpack.c.h.b16 %v128
    %v176 = vunpack.c.l.b16 %v129
    %v177 = vunpack.c.h.b16 %v129
    %v178 = vpack.c.b16 %v148, %v146
    %v179 = vpack.c.b16 %v149, %v147
    %v180 = vpack.c.b16 %v152, %v150
    %v181 = vpack.c.b16 %v153, %v151
    %v182 = vpack.c.b16 %v156, %v154
    %v183 = vpack.c.b16 %v157, %v155
    %v184 = vpack.c.b16 %v160, %v158
    %v185 = vpack.c.b16 %v161, %v159
    %v186 = vpack.c.b16 %v164, %v162
    %v187 = vpack.c.b16 %v165, %v163
    %v188 = vpack.c.b16 %v168, %v166
    %v189 = vpack.c.b16 %v169, %v167
    %v190 = vpack.c.b16 %v172, %v170
    %v191 = vpack.c.b16 %v173, %v171
    %v192 = vpack.c.b16 %v176, %v174
    %v193 = vpack.c.b16 %v177, %v175
    %210 = vmatprep.subr.bf16.mxu0 %v179
    %211 = vmatpush1.bf16.msra.mxu0 %v178
    %212 = vmatprep.subr.bf16.mxu0 %v181
    %213 = vmatpush1.bf16.msra.mxu0 %v180
    %214 = vmatprep.subr.bf16.mxu0 %v183
    %215 = vmatpush1.bf16.msra.mxu0 %v182
    %216 = vmatprep.subr.bf16.mxu0 %v185
    %217 = vmatpush1.bf16.msra.mxu0 %v184
    %218 = vmatprep.subr.bf16.mxu0 %v187
    %219 = vmatpush1.bf16.msra.mxu0 %v186
    %220 = vmatprep.subr.bf16.mxu0 %v189
    %221 = vmatpush1.bf16.msra.mxu0 %v188
    %222 = vmatprep.subr.bf16.mxu0 %v191
    %223 = vmatpush1.bf16.msra.mxu0 %v190
    %224 = vmatprep.subr.bf16.mxu0 %v193
    %225 = vmatpush1.bf16.msra.mxu0 %v192
    %226 = vmatprep.subr.bf16.mxu0 0
    %227 = vmatpush1.bf16.msra.mxu0 0
    %228 = vmatprep.subr.bf16.mxu0 0
    %229 = vmatpush1.bf16.msra.mxu0 0
    %230 = vmatprep.subr.bf16.mxu0 0
    %231 = vmatpush1.bf16.msra.mxu0 0
    %232 = vmatprep.subr.bf16.mxu0 0
    %233 = vmatpush1.bf16.msra.mxu0 0
    %234 = vmatprep.subr.bf16.mxu0 0
    %235 = vmatpush1.bf16.msra.mxu0 0
    %236 = vmatprep.subr.bf16.mxu0 0
    %237 = vmatpush1.bf16.msra.mxu0 0
    %238 = vmatprep.subr.bf16.mxu0 0
    %239 = vmatpush1.bf16.msra.mxu0 0
    %240 = vmatprep.subr.bf16.mxu0 0
    %241 = vmatpush1.bf16.msra.mxu0 0
    %242 = vmatprep.mubr.bf16.mxu0 0
    %243 = vmatmul.mubr.bf16.gmra.mrb[0].mxu0 %v98
    %v244 = vpop.f32.mrb[0].mxu0
    %v245 = vadd.f32 0.0, %v244
    %v246 = vpop.f32.mrb[0].mxu0
    %v247 = vadd.f32 0.0, %v246
    %v248 = vpop.f32.mrb[0].mxu0
    %v249 = vadd.f32 0.0, %v248
    %v250 = vpop.f32.mrb[0].mxu0
    %v251 = vadd.f32 0.0, %v250
    %252 = vmatprep.mubr.bf16.mxu0 0
    %253 = vmatmul.mubr.bf16.gmra.mrb[0].mxu0 %v99
    %v254 = vpop.f32.mrb[0].mxu0
    %v255 = vadd.f32 0.0, %v254
    %v256 = vpop.f32.mrb[0].mxu0
    %v257 = vadd.f32 0.0, %v256
    %v258 = vpop.f32.mrb[0].mxu0
    %v259 = vadd.f32 0.0, %v258
    %v260 = vpop.f32.mrb[0].mxu0
    %v261 = vadd.f32 0.0, %v260
    %262 = vmatprep.mubr.bf16.mxu0 0
    %263 = vmatmul.mubr.bf16.gmra.mrb[0].mxu0 %v100
    %v264 = vpop.f32.mrb[0].mxu0
    %v265 = vadd.f32 0.0, %v264
    %v266 = vpop.f32.mrb[0].mxu0
    %v267 = vadd.f32 0.0, %v266
    %v268 = vpop.f32.mrb[0].mxu0
    %v269 = vadd.f32 0.0, %v268
    %v270 = vpop.f32.mrb[0].mxu0
    %v271 = vadd.f32 0.0, %v270
    %272 = vmatprep.mubr.bf16.mxu0 0
    %273 = vmatmul.mubr.bf16.gmra.mrb[0].mxu0 %v101
    %v274 = vpop.f32.mrb[0].mxu0
    %v275 = vadd.f32 0.0, %v274
    %v276 = vpop.f32.mrb[0].mxu0
    %v277 = vadd.f32 0.0, %v276
    %v278 = vpop.f32.mrb[0].mxu0
    %v279 = vadd.f32 0.0, %v278
    %v280 = vpop.f32.mrb[0].mxu0
    %v281 = vadd.f32 0.0, %v280
    %282 = vmatprep.mubr.bf16.mxu0 0
    %283 = vmatmul.mubr.bf16.gmra.mrb[0].mxu0 %v102
    %v284 = vpop.f32.mrb[0].mxu0
    %v285 = vadd.f32 0.0, %v284
    %v286 = vpop.f32.mrb[0].mxu0
    %v287 = vadd.f32 0.0, %v286
    %v288 = vpop.f32.mrb[0].mxu0
    %v289 = vadd.f32 0.0, %v288
    %v290 = vpop.f32.mrb[0].mxu0
    %v291 = vadd.f32 0.0, %v290
    %292 = vmatprep.mubr.bf16.mxu0 0
    %293 = vmatmul.mubr.bf16.gmra.mrb[0].mxu0 %v103
    %v294 = vpop.f32.mrb[0].mxu0
    %v295 = vadd.f32 0.0, %v294
    %v296 = vpop.f32.mrb[0].mxu0
    %v297 = vadd.f32 0.0, %v296
    %v298 = vpop.f32.mrb[0].mxu0
    %v299 = vadd.f32 0.0, %v298
    %v300 = vpop.f32.mrb[0].mxu0
    %v301 = vadd.f32 0.0, %v300
    %302 = vmatprep.mubr.bf16.mxu0 0
    %303 = vmatmul.mubr.bf16.gmra.mrb[0].mxu0 %v104
    %v304 = vpop.f32.mrb[0].mxu0
    %v305 = vadd.f32 0.0, %v304
    %v306 = vpop.f32.mrb[0].mxu0
    %v307 = vadd.f32 0.0, %v306
    %v308 = vpop.f32.mrb[0].mxu0
    %v309 = vadd.f32 0.0, %v308
    %v310 = vpop.f32.mrb[0].mxu0
    %v311 = vadd.f32 0.0, %v310
    %312 = vmatprep.mubr.bf16.mxu0 0
    %313 = vmatmul.mubr.bf16.gmra.mrb[0].mxu0 %v105
    %v314 = vpop.f32.mrb[0].mxu0
    %v315 = vadd.f32 0.0, %v314
    %v316 = vpop.f32.mrb[0].mxu0
    %v317 = vadd.f32 0.0, %v316
    %v318 = vpop.f32.mrb[0].mxu0
    %v319 = vadd.f32 0.0, %v318
    %v320 = vpop.f32.mrb[0].mxu0
    %v321 = vadd.f32 0.0, %v320
    %322 = vmatprep.mubr.bf16.mxu0 0
    %323 = vmatmul.mubr.bf16.gmra.mrb[0].mxu0 %v106
    %v324 = vpop.f32.mrb[0].mxu0
    %v325 = vadd.f32 0.0, %v324
    %v326 = vpop.f32.mrb[0].mxu0
    %v327 = vadd.f32 0.0, %v326
    %v328 = vpop.f32.mrb[0].mxu0
    %v329 = vadd.f32 0.0, %v328
    %v330 = vpop.f32.mrb[0].mxu0
    %v331 = vadd.f32 0.0, %v330
    %332 = vmatprep.mubr.bf16.mxu0 0
    %333 = vmatmul.mubr.bf16.gmra.mrb[0].mxu0 %v107
    %v334 = vpop.f32.mrb[0].mxu0
    %v335 = vadd.f32 0.0, %v334
    %v336 = vpop.f32.mrb[0].mxu0
    %v337 = vadd.f32 0.0, %v336
    %v338 = vpop.f32.mrb[0].mxu0
    %v339 = vadd.f32 0.0, %v338
    %v340 = vpop.f32.mrb[0].mxu0
    %v341 = vadd.f32 0.0, %v340
    %342 = vmatprep.mubr.bf16.mxu0 0
    %343 = vmatmul.mubr.bf16.gmra.mrb[0].mxu0 %v108
    %v344 = vpop.f32.mrb[0].mxu0
    %v345 = vadd.f32 0.0, %v344
    %v346 = vpop.f32.mrb[0].mxu0
    %v347 = vadd.f32 0.0, %v346
    %v348 = vpop.f32.mrb[0].mxu0
    %v349 = vadd.f32 0.0, %v348
    %v350 = vpop.f32.mrb[0].mxu0
    %v351 = vadd.f32 0.0, %v350
    %352 = vmatprep.mubr.bf16.mxu0 0
    %353 = vmatmul.mubr.bf16.gmra.mrb[0].mxu0 %v109
    %v354 = vpop.f32.mrb[0].mxu0
    %v355 = vadd.f32 0.0, %v354
    %v356 = vpop.f32.mrb[0].mxu0
    %v357 = vadd.f32 0.0, %v356
    %v358 = vpop.f32.mrb[0].mxu0
    %v359 = vadd.f32 0.0, %v358
    %v360 = vpop.f32.mrb[0].mxu0
    %v361 = vadd.f32 0.0, %v360
    %362 = vmatprep.mubr.bf16.mxu0 0
    %363 = vmatmul.mubr.bf16.gmra.mrb[0].mxu0 %v110
    %v364 = vpop.f32.mrb[0].mxu0
    %v365 = vadd.f32 0.0, %v364
    %v366 = vpop.f32.mrb[0].mxu0
    %v367 = vadd.f32 0.0, %v366
    %v368 = vpop.f32.mrb[0].mxu0
    %v369 = vadd.f32 0.0, %v368
    %v370 = vpop.f32.mrb[0].mxu0
    %v371 = vadd.f32 0.0, %v370
    %372 = vmatprep.mubr.bf16.mxu0 0
    %373 = vmatmul.mubr.bf16.gmra.mrb[0].mxu0 %v111
    %v374 = vpop.f32.mrb[0].mxu0
    %v375 = vadd.f32 0.0, %v374
    %v376 = vpop.f32.mrb[0].mxu0
    %v377 = vadd.f32 0.0, %v376
    %v378 = vpop.f32.mrb[0].mxu0
    %v379 = vadd.f32 0.0, %v378
    %v380 = vpop.f32.mrb[0].mxu0
    %v381 = vadd.f32 0.0, %v380
    %382 = vmatprep.mubr.bf16.mxu0 0
    %383 = vmatmul.mubr.bf16.gmra.mrb[0].mxu0 %v112
    %v384 = vpop.f32.mrb[0].mxu0
    %v385 = vadd.f32 0.0, %v384
    %v386 = vpop.f32.mrb[0].mxu0
    %v387 = vadd.f32 0.0, %v386
    %v388 = vpop.f32.mrb[0].mxu0
    %v389 = vadd.f32 0.0, %v388
    %v390 = vpop.f32.mrb[0].mxu0
    %v391 = vadd.f32 0.0, %v390
    %392 = vmatprep.mubr.bf16.mxu0 0
    %393 = vmatmul.mubr.bf16.gmra.mrb[0].mxu0 %v113
    %v394 = vpop.f32.mrb[0].mxu0
    %v395 = vadd.f32 0.0, %v394
    %v396 = vpop.f32.mrb[0].mxu0
    %v397 = vadd.f32 0.0, %v396
    %v398 = vpop.f32.mrb[0].mxu0
    %v399 = vadd.f32 0.0, %v398
    %v400 = vpop.f32.mrb[0].mxu0
    %v401 = vadd.f32 0.0, %v400
    %402 = vdwg.mxu0
    %v403 = vld [vmem:[%s2] sm:$0x3]
    %v405 = vlaneseq
    %v406 = vshrl.u32 %v405, 7
    %v407 = vsub.s32 0, %v406
    %v408 = vrot.slane %v403, %v407
    %v409 = vlaneseq
    %v410 = vshrl.u32 %v409, 7
    %v411 = vsub.s32 1, %v410
    %v412 = vrot.slane %v403, %v411
    %v415 = vmul.f32 %v245, %v408
    %v416 = vmul.f32 %v247, %v412
    %v417 = vmul.f32 %v249, %v408
    %v418 = vmul.f32 %v251, %v412
    %v419 = vmul.f32 %v255, %v408
    %v420 = vmul.f32 %v257, %v412
    %v421 = vmul.f32 %v259, %v408
    %v422 = vmul.f32 %v261, %v412
    %v423 = vmul.f32 %v265, %v408
    %v424 = vmul.f32 %v267, %v412
    %v425 = vmul.f32 %v269, %v408
    %v426 = vmul.f32 %v271, %v412
    %v427 = vmul.f32 %v275, %v408
    %v428 = vmul.f32 %v277, %v412
    %v429 = vmul.f32 %v279, %v408
    %v430 = vmul.f32 %v281, %v412
    %v431 = vmul.f32 %v285, %v408
    %v432 = vmul.f32 %v287, %v412
    %v433 = vmul.f32 %v289, %v408
    %v434 = vmul.f32 %v291, %v412
    %v435 = vmul.f32 %v295, %v408
    %v436 = vmul.f32 %v297, %v412
    %v437 = vmul.f32 %v299, %v408
    %v438 = vmul.f32 %v301, %v412
    %v439 = vmul.f32 %v305, %v408
    %v440 = vmul.f32 %v307, %v412
    %v441 = vmul.f32 %v309, %v408
    %v442 = vmul.f32 %v311, %v412
    %v443 = vmul.f32 %v315, %v408
    %v444 = vmul.f32 %v317, %v412
    %v445 = vmul.f32 %v319, %v408
    %v446 = vmul.f32 %v321, %v412
    %v447 = vmul.f32 %v325, %v408
    %v448 = vmul.f32 %v327, %v412
    %v449 = vmul.f32 %v329, %v408
    %v450 = vmul.f32 %v331, %v412
    %v451 = vmul.f32 %v335, %v408
    %v452 = vmul.f32 %v337, %v412
    %v453 = vmul.f32 %v339, %v408
    %v454 = vmul.f32 %v341, %v412
    %v455 = vmul.f32 %v345, %v408
    %v456 = vmul.f32 %v347, %v412
    %v457 = vmul.f32 %v349, %v408
    %v458 = vmul.f32 %v351, %v412
    %v459 = vmul.f32 %v355, %v408
    %v460 = vmul.f32 %v357, %v412
    %v461 = vmul.f32 %v359, %v408
    %v462 = vmul.f32 %v361, %v412
    %v463 = vmul.f32 %v365, %v408
    %v464 = vmul.f32 %v367, %v412
    %v465 = vmul.f32 %v369, %v408
    %v466 = vmul.f32 %v371, %v412
    %v467 = vmul.f32 %v375, %v408
    %v468 = vmul.f32 %v377, %v412
    %v469 = vmul.f32 %v379, %v408
    %v470 = vmul.f32 %v381, %v412
    %v471 = vmul.f32 %v385, %v408
    %v472 = vmul.f32 %v387, %v412
    %v473 = vmul.f32 %v389, %v408
    %v474 = vmul.f32 %v391, %v412
    %v475 = vmul.f32 %v395, %v408
    %v476 = vmul.f32 %v397, %v412
    %v477 = vmul.f32 %v399, %v408
    %v478 = vmul.f32 %v401, %v412
    %v479 = vld [vmem:[%s3] sm:$0x3]
    %v481 = vlaneseq
    %v482 = vshrl.u32 %v481, 7
    %v483 = vsub.s32 0, %v482
    %v484 = vrot.slane %v479, %v483
    %v485 = vlaneseq
    %v486 = vshrl.u32 %v485, 7
    %v487 = vsub.s32 1, %v486
    %v488 = vrot.slane %v479, %v487
    %v491 = vadd.f32 %v415, %v484
    %v492 = vadd.f32 %v416, %v488
    %v493 = vadd.f32 %v417, %v484
    %v494 = vadd.f32 %v418, %v488
    %v495 = vadd.f32 %v419, %v484
    %v496 = vadd.f32 %v420, %v488
    %v497 = vadd.f32 %v421, %v484
    %v498 = vadd.f32 %v422, %v488
    %v499 = vadd.f32 %v423, %v484
    %v500 = vadd.f32 %v424, %v488
    %v501 = vadd.f32 %v425, %v484
    %v502 = vadd.f32 %v426, %v488
    %v503 = vadd.f32 %v427, %v484
    %v504 = vadd.f32 %v428, %v488
    %v505 = vadd.f32 %v429, %v484
    %v506 = vadd.f32 %v430, %v488
    %v507 = vadd.f32 %v431, %v484
    %v508 = vadd.f32 %v432, %v488
    %v509 = vadd.f32 %v433, %v484
    %v510 = vadd.f32 %v434, %v488
    %v511 = vadd.f32 %v435, %v484
    %v512 = vadd.f32 %v436, %v488
    %v513 = vadd.f32 %v437, %v484
    %v514 = vadd.f32 %v438, %v488
    %v515 = vadd.f32 %v439, %v484
    %v516 = vadd.f32 %v440, %v488
    %v517 = vadd.f32 %v441, %v484
    %v518 = vadd.f32 %v442, %v488
    %v519 = vadd.f32 %v443, %v484
    %v520 = vadd.f32 %v444, %v488
    %v521 = vadd.f32 %v445, %v484
    %v522 = vadd.f32 %v446, %v488
    %v523 = vadd.f32 %v447, %v484
    %v524 = vadd.f32 %v448, %v488
    %v525 = vadd.f32 %v449, %v484
    %v526 = vadd.f32 %v450, %v488
    %v527 = vadd.f32 %v451, %v484
    %v528 = vadd.f32 %v452, %v488
    %v529 = vadd.f32 %v453, %v484
    %v530 = vadd.f32 %v454, %v488
    %v531 = vadd.f32 %v455, %v484
    %v532 = vadd.f32 %v456, %v488
    %v533 = vadd.f32 %v457, %v484
    %v534 = vadd.f32 %v458, %v488
    %v535 = vadd.f32 %v459, %v484
    %v536 = vadd.f32 %v460, %v488
    %v537 = vadd.f32 %v461, %v484
    %v538 = vadd.f32 %v462, %v488
    %v539 = vadd.f32 %v463, %v484
    %v540 = vadd.f32 %v464, %v488
    %v541 = vadd.f32 %v465, %v484
    %v542 = vadd.f32 %v466, %v488
    %v543 = vadd.f32 %v467, %v484
    %v544 = vadd.f32 %v468, %v488
    %v545 = vadd.f32 %v469, %v484
    %v546 = vadd.f32 %v470, %v488
    %v547 = vadd.f32 %v471, %v484
    %v548 = vadd.f32 %v472, %v488
    %v549 = vadd.f32 %v473, %v484
    %v550 = vadd.f32 %v474, %v488
    %v551 = vadd.f32 %v475, %v484
    %v552 = vadd.f32 %v476, %v488
    %v553 = vadd.f32 %v477, %v484
    %v554 = vadd.f32 %v478, %v488
    %v555 = vmax.f32 %v491, 0.0
    %v556 = vmax.f32 %v492, 0.0
    %v557 = vmax.f32 %v493, 0.0
    %v558 = vmax.f32 %v494, 0.0
    %v559 = vmax.f32 %v495, 0.0
    %v560 = vmax.f32 %v496, 0.0
    %v561 = vmax.f32 %v497, 0.0
    %v562 = vmax.f32 %v498, 0.0
    %v563 = vmax.f32 %v499, 0.0
    %v564 = vmax.f32 %v500, 0.0
    %v565 = vmax.f32 %v501, 0.0
    %v566 = vmax.f32 %v502, 0.0
    %v567 = vmax.f32 %v503, 0.0
    %v568 = vmax.f32 %v504, 0.0
    %v569 = vmax.f32 %v505, 0.0
    %v570 = vmax.f32 %v506, 0.0
    %v571 = vmax.f32 %v507, 0.0
    %v572 = vmax.f32 %v508, 0.0
    %v573 = vmax.f32 %v509, 0.0
    %v574 = vmax.f32 %v510, 0.0
    %v575 = vmax.f32 %v511, 0.0
    %v576 = vmax.f32 %v512, 0.0
    %v577 = vmax.f32 %v513, 0.0
    %v578 = vmax.f32 %v514, 0.0
    %v579 = vmax.f32 %v515, 0.0
    %v580 = vmax.f32 %v516, 0.0
    %v581 = vmax.f32 %v517, 0.0
    %v582 = vmax.f32 %v518, 0.0
    %v583 = vmax.f32 %v519, 0.0
    %v584 = vmax.f32 %v520, 0.0
    %v585 = vmax.f32 %v521, 0.0
    %v586 = vmax.f32 %v522, 0.0
    %v587 = vmax.f32 %v523, 0.0
    %v588 = vmax.f32 %v524, 0.0
    %v589 = vmax.f32 %v525, 0.0
    %v590 = vmax.f32 %v526, 0.0
    %v591 = vmax.f32 %v527, 0.0
    %v592 = vmax.f32 %v528, 0.0
    %v593 = vmax.f32 %v529, 0.0
    %v594 = vmax.f32 %v530, 0.0
    %v595 = vmax.f32 %v531, 0.0
    %v596 = vmax.f32 %v532, 0.0
    %v597 = vmax.f32 %v533, 0.0
    %v598 = vmax.f32 %v534, 0.0
    %v599 = vmax.f32 %v535, 0.0
    %v600 = vmax.f32 %v536, 0.0
    %v601 = vmax.f32 %v537, 0.0
    %v602 = vmax.f32 %v538, 0.0
    %v603 = vmax.f32 %v539, 0.0
    %v604 = vmax.f32 %v540, 0.0
    %v605 = vmax.f32 %v541, 0.0
    %v606 = vmax.f32 %v542, 0.0
    %v607 = vmax.f32 %v543, 0.0
    %v608 = vmax.f32 %v544, 0.0
    %v609 = vmax.f32 %v545, 0.0
    %v610 = vmax.f32 %v546, 0.0
    %v611 = vmax.f32 %v547, 0.0
    %v612 = vmax.f32 %v548, 0.0
    %v613 = vmax.f32 %v549, 0.0
    %v614 = vmax.f32 %v550, 0.0
    %v615 = vmax.f32 %v551, 0.0
    %v616 = vmax.f32 %v552, 0.0
    %v617 = vmax.f32 %v553, 0.0
    %v618 = vmax.f32 %v554, 0.0
    %v619 = vpack.c.bf16 %v557, %v555
    %v620 = vpack.c.bf16 %v558, %v556
    %v621 = vpack.c.bf16 %v561, %v559
    %v622 = vpack.c.bf16 %v562, %v560
    %v623 = vpack.c.bf16 %v565, %v563
    %v624 = vpack.c.bf16 %v566, %v564
    %v625 = vpack.c.bf16 %v569, %v567
    %v626 = vpack.c.bf16 %v570, %v568
    %v627 = vpack.c.bf16 %v573, %v571
    %v628 = vpack.c.bf16 %v574, %v572
    %v629 = vpack.c.bf16 %v577, %v575
    %v630 = vpack.c.bf16 %v578, %v576
    %v631 = vpack.c.bf16 %v581, %v579
    %v632 = vpack.c.bf16 %v582, %v580
    %v633 = vpack.c.bf16 %v585, %v583
    %v634 = vpack.c.bf16 %v586, %v584
    %v635 = vpack.c.bf16 %v589, %v587
    %v636 = vpack.c.bf16 %v590, %v588
    %v637 = vpack.c.bf16 %v593, %v591
    %v638 = vpack.c.bf16 %v594, %v592
    %v639 = vpack.c.bf16 %v597, %v595
    %v640 = vpack.c.bf16 %v598, %v596
    %v641 = vpack.c.bf16 %v601, %v599
    %v642 = vpack.c.bf16 %v602, %v600
    %v643 = vpack.c.bf16 %v605, %v603
    %v644 = vpack.c.bf16 %v606, %v604
    %v645 = vpack.c.bf16 %v609, %v607
    %v646 = vpack.c.bf16 %v610, %v608
    %v647 = vpack.c.bf16 %v613, %v611
    %v648 = vpack.c.bf16 %v614, %v612
    %v649 = vpack.c.bf16 %v617, %v615
    %v650 = vpack.c.bf16 %v618, %v616
    %v651 = vld [vmem:[#allocation7] sm:$0xf]
    %v652 = vld [vmem:[#allocation7 + $0x4] sm:$0xf]
    %v653 = vld [vmem:[#allocation7 + $0x8] sm:$0xf]
    %v654 = vld [vmem:[#allocation7 + $0xc] sm:$0xf]
    %v655 = vld [vmem:[#allocation7 + $0x10] sm:$0xf]
    %v656 = vld [vmem:[#allocation7 + $0x14] sm:$0xf]
    %v657 = vld [vmem:[#allocation7 + $0x18] sm:$0xf]
    %v658 = vld [vmem:[#allocation7 + $0x1c] sm:$0xf]
    %v659 = vld [vmem:[#allocation7 + $0x20] sm:$0xf]
    %v660 = vld [vmem:[#allocation7 + $0x24] sm:$0xf]
    %v661 = vld [vmem:[#allocation7 + $0x28] sm:$0xf]
    %v662 = vld [vmem:[#allocation7 + $0x2c] sm:$0xf]
    %v663 = vld [vmem:[#allocation7 + $0x30] sm:$0xf]
    %v664 = vld [vmem:[#allocation7 + $0x34] sm:$0xf]
    %v665 = vld [vmem:[#allocation7 + $0x38] sm:$0xf]
    %v666 = vld [vmem:[#allocation7 + $0x3c] sm:$0xf]
    %v667 = vld [vmem:[#allocation7 + $0x40] sm:$0xf]
    %v668 = vld [vmem:[#allocation7 + $0x44] sm:$0xf]
    %v669 = vld [vmem:[#allocation7 + $0x48] sm:$0xf]
    %v670 = vld [vmem:[#allocation7 + $0x4c] sm:$0xf]
    %v671 = vld [vmem:[#allocation7 + $0x50] sm:$0xf]
    %v672 = vld [vmem:[#allocation7 + $0x54] sm:$0xf]
    %v673 = vld [vmem:[#allocation7 + $0x58] sm:$0xf]
    %v674 = vld [vmem:[#allocation7 + $0x5c] sm:$0xf]
    %v675 = vld [vmem:[#allocation7 + $0x60] sm:$0xf]
    %v676 = vld [vmem:[#allocation7 + $0x64] sm:$0xf]
    %v677 = vld [vmem:[#allocation7 + $0x68] sm:$0xf]
    %v678 = vld [vmem:[#allocation7 + $0x6c] sm:$0xf]
    %v679 = vld [vmem:[#allocation7 + $0x70] sm:$0xf]
    %v680 = vld [vmem:[#allocation7 + $0x74] sm:$0xf]
    %v681 = vld [vmem:[#allocation7 + $0x78] sm:$0xf]
    %v682 = vld [vmem:[#allocation7 + $0x7c] sm:$0xf]
    %v683 = vld [vmem:[%s5] sm:$0x1]
    %v685 = vlaneseq
    %v686 = vshrl.u32 %v685, 7
    %v687 = vsub.s32 0, %v686
    %v688 = vrot.slane %v683, %v687
    %v722 = vunpack.c.l.b16 %v651
    %v723 = vunpack.c.l.b16 %v652
    %v724 = vunpack.c.l.b16 %v653
    %v725 = vunpack.c.l.b16 %v654
    %v726 = vunpack.c.l.b16 %v655
    %v727 = vunpack.c.l.b16 %v656
    %v728 = vunpack.c.l.b16 %v657
    %v729 = vunpack.c.l.b16 %v658
    %v730 = vunpack.c.l.b16 %v659
    %v731 = vunpack.c.l.b16 %v660
    %v732 = vunpack.c.l.b16 %v661
    %v733 = vunpack.c.l.b16 %v662
    %v734 = vunpack.c.l.b16 %v663
    %v735 = vunpack.c.l.b16 %v664
    %v736 = vunpack.c.l.b16 %v665
    %v737 = vunpack.c.l.b16 %v666
    %v738 = vunpack.c.l.b16 %v667
    %v739 = vunpack.c.l.b16 %v668
    %v740 = vunpack.c.l.b16 %v669
    %v741 = vunpack.c.l.b16 %v670
    %v742 = vunpack.c.l.b16 %v671
    %v743 = vunpack.c.l.b16 %v672
    %v744 = vunpack.c.l.b16 %v673
    %v745 = vunpack.c.l.b16 %v674
    %v746 = vunpack.c.l.b16 %v675
    %v747 = vunpack.c.l.b16 %v676
    %v748 = vunpack.c.l.b16 %v677
    %v749 = vunpack.c.l.b16 %v678
    %v750 = vunpack.c.l.b16 %v679
    %v751 = vunpack.c.l.b16 %v680
    %v752 = vunpack.c.l.b16 %v681
    %v753 = vunpack.c.l.b16 %v682
    %v754 = vpack.c.b16 %v723, %v722
    %v755 = vpack.c.b16 %v725, %v724
    %v756 = vpack.c.b16 %v727, %v726
    %v757 = vpack.c.b16 %v729, %v728
    %v758 = vpack.c.b16 %v731, %v730
    %v759 = vpack.c.b16 %v733, %v732
    %v760 = vpack.c.b16 %v735, %v734
    %v761 = vpack.c.b16 %v737, %v736
    %v762 = vpack.c.b16 %v739, %v738
    %v763 = vpack.c.b16 %v741, %v740
    %v764 = vpack.c.b16 %v743, %v742
    %v765 = vpack.c.b16 %v745, %v744
    %v766 = vpack.c.b16 %v747, %v746
    %v767 = vpack.c.b16 %v749, %v748
    %v768 = vpack.c.b16 %v751, %v750
    %v769 = vpack.c.b16 %v753, %v752
    %786 = vmatprep.subr.bf16.mxu0 0
    %787 = vmatpush1.bf16.msra.mxu0 %v754
    %788 = vmatprep.subr.bf16.mxu0 0
    %789 = vmatpush1.bf16.msra.mxu0 %v755
    %790 = vmatprep.subr.bf16.mxu0 0
    %791 = vmatpush1.bf16.msra.mxu0 %v756
    %792 = vmatprep.subr.bf16.mxu0 0
    %793 = vmatpush1.bf16.msra.mxu0 %v757
    %794 = vmatprep.subr.bf16.mxu0 0
    %795 = vmatpush1.bf16.msra.mxu0 %v758
    %796 = vmatprep.subr.bf16.mxu0 0
    %797 = vmatpush1.bf16.msra.mxu0 %v759
    %798 = vmatprep.subr.bf16.mxu0 0
    %799 = vmatpush1.bf16.msra.mxu0 %v760
    %800 = vmatprep.subr.bf16.mxu0 0
    %801 = vmatpush1.bf16.msra.mxu0 %v761
    %802 = vmatprep.subr.bf16.mxu0 0
    %803 = vmatpush1.bf16.msra.mxu0 %v762
    %804 = vmatprep.subr.bf16.mxu0 0
    %805 = vmatpush1.bf16.msra.mxu0 %v763
    %806 = vmatprep.subr.bf16.mxu0 0
    %807 = vmatpush1.bf16.msra.mxu0 %v764
    %808 = vmatprep.subr.bf16.mxu0 0
    %809 = vmatpush1.bf16.msra.mxu0 %v765
    %810 = vmatprep.subr.bf16.mxu0 0
    %811 = vmatpush1.bf16.msra.mxu0 %v766
    %812 = vmatprep.subr.bf16.mxu0 0
    %813 = vmatpush1.bf16.msra.mxu0 %v767
    %814 = vmatprep.subr.bf16.mxu0 0
    %815 = vmatpush1.bf16.msra.mxu0 %v768
    %816 = vmatprep.subr.bf16.mxu0 0
    %817 = vmatpush1.bf16.msra.mxu0 %v769
    %818 = vmatprep.mubr.bf16.mxu0 %v620
    %819 = vmatmul.mubr.bf16.gmra.mrb[0].mxu0 %v619
    %v820 = vpop.f32.mrb[0].mxu0
    %v821 = vadd.f32 %v688, %v820
    %v822 = vpop.f32.mrb[0].mxu0
    %v823 = vpop.f32.mrb[0].mxu0
    %v824 = vadd.f32 %v688, %v823
    %v825 = vpop.f32.mrb[0].mxu0
    %826 = vmatprep.mubr.bf16.mxu0 %v622
    %827 = vmatmul.mubr.bf16.gmra.mrb[0].mxu0 %v621
    %v828 = vpop.f32.mrb[0].mxu0
    %v829 = vadd.f32 %v688, %v828
    %v830 = vpop.f32.mrb[0].mxu0
    %v831 = vpop.f32.mrb[0].mxu0
    %v832 = vadd.f32 %v688, %v831
    %v833 = vpop.f32.mrb[0].mxu0
    %834 = vmatprep.mubr.bf16.mxu0 %v624
    %835 = vmatmul.mubr.bf16.gmra.mrb[0].mxu0 %v623
    %v836 = vpop.f32.mrb[0].mxu0
    %v837 = vadd.f32 %v688, %v836
    %v838 = vpop.f32.mrb[0].mxu0
    %v839 = vpop.f32.mrb[0].mxu0
    %v840 = vadd.f32 %v688, %v839
    %v841 = vpop.f32.mrb[0].mxu0
    %842 = vmatprep.mubr.bf16.mxu0 %v626
    %843 = vmatmul.mubr.bf16.gmra.mrb[0].mxu0 %v625
    %v844 = vpop.f32.mrb[0].mxu0
    %v845 = vadd.f32 %v688, %v844
    %v846 = vpop.f32.mrb[0].mxu0
    %v847 = vpop.f32.mrb[0].mxu0
    %v848 = vadd.f32 %v688, %v847
    %v849 = vpop.f32.mrb[0].mxu0
    %850 = vmatprep.mubr.bf16.mxu0 %v628
    %851 = vmatmul.mubr.bf16.gmra.mrb[0].mxu0 %v627
    %v852 = vpop.f32.mrb[0].mxu0
    %v853 = vadd.f32 %v688, %v852
    %v854 = vpop.f32.mrb[0].mxu0
    %v855 = vpop.f32.mrb[0].mxu0
    %v856 = vadd.f32 %v688, %v855
    %v857 = vpop.f32.mrb[0].mxu0
    %858 = vmatprep.mubr.bf16.mxu0 %v630
    %859 = vmatmul.mubr.bf16.gmra.mrb[0].mxu0 %v629
    %v860 = vpop.f32.mrb[0].mxu0
    %v861 = vadd.f32 %v688, %v860
    %v862 = vpop.f32.mrb[0].mxu0
    %v863 = vpop.f32.mrb[0].mxu0
    %v864 = vadd.f32 %v688, %v863
    %v865 = vpop.f32.mrb[0].mxu0
    %866 = vmatprep.mubr.bf16.mxu0 %v632
    %867 = vmatmul.mubr.bf16.gmra.mrb[0].mxu0 %v631
    %v868 = vpop.f32.mrb[0].mxu0
    %v869 = vadd.f32 %v688, %v868
    %v870 = vpop.f32.mrb[0].mxu0
    %v871 = vpop.f32.mrb[0].mxu0
    %v872 = vadd.f32 %v688, %v871
    %v873 = vpop.f32.mrb[0].mxu0
    %874 = vmatprep.mubr.bf16.mxu0 %v634
    %875 = vmatmul.mubr.bf16.gmra.mrb[0].mxu0 %v633
    %v876 = vpop.f32.mrb[0].mxu0
    %v877 = vadd.f32 %v688, %v876
    %v878 = vpop.f32.mrb[0].mxu0
    %v879 = vpop.f32.mrb[0].mxu0
    %v880 = vadd.f32 %v688, %v879
    %v881 = vpop.f32.mrb[0].mxu0
    %882 = vmatprep.mubr.bf16.mxu0 %v636
    %883 = vmatmul.mubr.bf16.gmra.mrb[0].mxu0 %v635
    %v884 = vpop.f32.mrb[0].mxu0
    %v885 = vadd.f32 %v688, %v884
    %v886 = vpop.f32.mrb[0].mxu0
    %v887 = vpop.f32.mrb[0].mxu0
    %v888 = vadd.f32 %v688, %v887
    %v889 = vpop.f32.mrb[0].mxu0
    %890 = vmatprep.mubr.bf16.mxu0 %v638
    %891 = vmatmul.mubr.bf16.gmra.mrb[0].mxu0 %v637
    %v892 = vpop.f32.mrb[0].mxu0
    %v893 = vadd.f32 %v688, %v892
    %v894 = vpop.f32.mrb[0].mxu0
    %v895 = vpop.f32.mrb[0].mxu0
    %v896 = vadd.f32 %v688, %v895
    %v897 = vpop.f32.mrb[0].mxu0
    %898 = vmatprep.mubr.bf16.mxu0 %v640
    %899 = vmatmul.mubr.bf16.gmra.mrb[0].mxu0 %v639
    %v900 = vpop.f32.mrb[0].mxu0
    %v901 = vadd.f32 %v688, %v900
    %v902 = vpop.f32.mrb[0].mxu0
    %v903 = vpop.f32.mrb[0].mxu0
    %v904 = vadd.f32 %v688, %v903
    %v905 = vpop.f32.mrb[0].mxu0
    %906 = vmatprep.mubr.bf16.mxu0 %v642
    %907 = vmatmul.mubr.bf16.gmra.mrb[0].mxu0 %v641
    %v908 = vpop.f32.mrb[0].mxu0
    %v909 = vadd.f32 %v688, %v908
    %v910 = vpop.f32.mrb[0].mxu0
    %v911 = vpop.f32.mrb[0].mxu0
    %v912 = vadd.f32 %v688, %v911
    %v913 = vpop.f32.mrb[0].mxu0
    %914 = vmatprep.mubr.bf16.mxu0 %v644
    %915 = vmatmul.mubr.bf16.gmra.mrb[0].mxu0 %v643
    %v916 = vpop.f32.mrb[0].mxu0
    %v917 = vadd.f32 %v688, %v916
    %v918 = vpop.f32.mrb[0].mxu0
    %v919 = vpop.f32.mrb[0].mxu0
    %v920 = vadd.f32 %v688, %v919
    %v921 = vpop.f32.mrb[0].mxu0
    %922 = vmatprep.mubr.bf16.mxu0 %v646
    %923 = vmatmul.mubr.bf16.gmra.mrb[0].mxu0 %v645
    %v924 = vpop.f32.mrb[0].mxu0
    %v925 = vadd.f32 %v688, %v924
    %v926 = vpop.f32.mrb[0].mxu0
    %v927 = vpop.f32.mrb[0].mxu0
    %v928 = vadd.f32 %v688, %v927
    %v929 = vpop.f32.mrb[0].mxu0
    %930 = vmatprep.mubr.bf16.mxu0 %v648
    %931 = vmatmul.mubr.bf16.gmra.mrb[0].mxu0 %v647
    %v932 = vpop.f32.mrb[0].mxu0
    %v933 = vadd.f32 %v688, %v932
    %v934 = vpop.f32.mrb[0].mxu0
    %v935 = vpop.f32.mrb[0].mxu0
    %v936 = vadd.f32 %v688, %v935
    %v937 = vpop.f32.mrb[0].mxu0
    %938 = vmatprep.mubr.bf16.mxu0 %v650
    %939 = vmatmul.mubr.bf16.gmra.mrb[0].mxu0 %v649
    %v940 = vpop.f32.mrb[0].mxu0
    %v941 = vadd.f32 %v688, %v940
    %v942 = vpop.f32.mrb[0].mxu0
    %v943 = vpop.f32.mrb[0].mxu0
    %v944 = vadd.f32 %v688, %v943
    %v945 = vpop.f32.mrb[0].mxu0
    %946 = vdwg.mxu0
    %v947 = vpack.c.bf16 %v824, %v821
    %v948 = vpack.c.bf16 %v832, %v829
    %v949 = vpack.c.bf16 %v840, %v837
    %v950 = vpack.c.bf16 %v848, %v845
    %v951 = vpack.c.bf16 %v856, %v853
    %v952 = vpack.c.bf16 %v864, %v861
    %v953 = vpack.c.bf16 %v872, %v869
    %v954 = vpack.c.bf16 %v880, %v877
    %v955 = vpack.c.bf16 %v888, %v885
    %v956 = vpack.c.bf16 %v896, %v893
    %v957 = vpack.c.bf16 %v904, %v901
    %v958 = vpack.c.bf16 %v912, %v909
    %v959 = vpack.c.bf16 %v920, %v917
    %v960 = vpack.c.bf16 %v928, %v925
    %v961 = vpack.c.bf16 %v936, %v933
    %v962 = vpack.c.bf16 %v944, %v941
    %v979 = vunpack.c.l.b16 %v947
    %v980 = vunpack.c.h.b16 %v947
    %v981 = vunpack.c.l.b16 %v948
    %v982 = vunpack.c.h.b16 %v948
    %v983 = vunpack.c.l.b16 %v949
    %v984 = vunpack.c.h.b16 %v949
    %v985 = vunpack.c.l.b16 %v950
    %v986 = vunpack.c.h.b16 %v950
    %v987 = vunpack.c.l.b16 %v951
    %v988 = vunpack.c.h.b16 %v951
    %v989 = vunpack.c.l.b16 %v952
    %v990 = vunpack.c.h.b16 %v952
    %v991 = vunpack.c.l.b16 %v953
    %v992 = vunpack.c.h.b16 %v953
    %v993 = vunpack.c.l.b16 %v954
    %v994 = vunpack.c.h.b16 %v954
    %v995 = vunpack.c.l.b16 %v955
    %v996 = vunpack.c.h.b16 %v955
    %v997 = vunpack.c.l.b16 %v956
    %v998 = vunpack.c.h.b16 %v956
    %v999 = vunpack.c.l.b16 %v957
    %v1000 = vunpack.c.h.b16 %v957
    %v1001 = vunpack.c.l.b16 %v958
    %v1002 = vunpack.c.h.b16 %v958
    %v1003 = vunpack.c.l.b16 %v959
    %v1004 = vunpack.c.h.b16 %v959
    %v1005 = vunpack.c.l.b16 %v960
    %v1006 = vunpack.c.h.b16 %v960
    %v1007 = vunpack.c.l.b16 %v961
    %v1008 = vunpack.c.h.b16 %v961
    %v1009 = vunpack.c.l.b16 %v962
    %v1010 = vunpack.c.h.b16 %v962
    %v1011 = vpack.c.b16 %v979, %v979
    %v1012 = vpack.c.b16 %v980, %v980
    %v1013 = vpack.c.b16 %v981, %v981
    %v1014 = vpack.c.b16 %v982, %v982
    %v1015 = vpack.c.b16 %v983, %v983
    %v1016 = vpack.c.b16 %v984, %v984
    %v1017 = vpack.c.b16 %v985, %v985
    %v1018 = vpack.c.b16 %v986, %v986
    %v1019 = vpack.c.b16 %v987, %v987
    %v1020 = vpack.c.b16 %v988, %v988
    %v1021 = vpack.c.b16 %v989, %v989
    %v1022 = vpack.c.b16 %v990, %v990
    %v1023 = vpack.c.b16 %v991, %v991
    %v1024 = vpack.c.b16 %v992, %v992
    %v1025 = vpack.c.b16 %v993, %v993
    %v1026 = vpack.c.b16 %v994, %v994
    %v1027 = vpack.c.b16 %v995, %v995
    %v1028 = vpack.c.b16 %v996, %v996
    %v1029 = vpack.c.b16 %v997, %v997
    %v1030 = vpack.c.b16 %v998, %v998
    %v1031 = vpack.c.b16 %v999, %v999
    %v1032 = vpack.c.b16 %v1000, %v1000
    %v1033 = vpack.c.b16 %v1001, %v1001
    %v1034 = vpack.c.b16 %v1002, %v1002
    %v1035 = vpack.c.b16 %v1003, %v1003
    %v1036 = vpack.c.b16 %v1004, %v1004
    %v1037 = vpack.c.b16 %v1005, %v1005
    %v1038 = vpack.c.b16 %v1006, %v1006
    %v1039 = vpack.c.b16 %v1007, %v1007
    %v1040 = vpack.c.b16 %v1008, %v1008
    %v1041 = vpack.c.b16 %v1009, %v1009
    %v1042 = vpack.c.b16 %v1010, %v1010
    %1075 = vst [vmem:[#allocation8] sm:$0xf] %v1011
    %1076 = vst [vmem:[#allocation8 + $0x4] sm:$0xf] %v1012
    %1077 = vst [vmem:[#allocation8 + $0x8] sm:$0xf] %v1013
    %1078 = vst [vmem:[#allocation8 + $0xc] sm:$0xf] %v1014
    %1079 = vst [vmem:[#allocation8 + $0x10] sm:$0xf] %v1015
    %1080 = vst [vmem:[#allocation8 + $0x14] sm:$0xf] %v1016
    %1081 = vst [vmem:[#allocation8 + $0x18] sm:$0xf] %v1017
    %1082 = vst [vmem:[#allocation8 + $0x1c] sm:$0xf] %v1018
    %1083 = vst [vmem:[#allocation8 + $0x20] sm:$0xf] %v1019
    %1084 = vst [vmem:[#allocation8 + $0x24] sm:$0xf] %v1020
    %1085 = vst [vmem:[#allocation8 + $0x28] sm:$0xf] %v1021
    %1086 = vst [vmem:[#allocation8 + $0x2c] sm:$0xf] %v1022
    %1087 = vst [vmem:[#allocation8 + $0x30] sm:$0xf] %v1023
    %1088 = vst [vmem:[#allocation8 + $0x34] sm:$0xf] %v1024
    %1089 = vst [vmem:[#allocation8 + $0x38] sm:$0xf] %v1025
    %1090 = vst [vmem:[#allocation8 + $0x3c] sm:$0xf] %v1026
    %1091 = vst [vmem:[#allocation8 + $0x40] sm:$0xf] %v1027
    %1092 = vst [vmem:[#allocation8 + $0x44] sm:$0xf] %v1028
    %1093 = vst [vmem:[#allocation8 + $0x48] sm:$0xf] %v1029
    %1094 = vst [vmem:[#allocation8 + $0x4c] sm:$0xf] %v1030
    %1095 = vst [vmem:[#allocation8 + $0x50] sm:$0xf] %v1031
    %1096 = vst [vmem:[#allocation8 + $0x54] sm:$0xf] %v1032
    %1097 = vst [vmem:[#allocation8 + $0x58] sm:$0xf] %v1033
    %1098 = vst [vmem:[#allocation8 + $0x5c] sm:$0xf] %v1034
    %1099 = vst [vmem:[#allocation8 + $0x60] sm:$0xf] %v1035
    %1100 = vst [vmem:[#allocation8 + $0x64] sm:$0xf] %v1036
    %1101 = vst [vmem:[#allocation8 + $0x68] sm:$0xf] %v1037
    %1102 = vst [vmem:[#allocation8 + $0x6c] sm:$0xf] %v1038
    %1103 = vst [vmem:[#allocation8 + $0x70] sm:$0xf] %v1039
    %1104 = vst [vmem:[#allocation8 + $0x74] sm:$0xf] %v1040
    %1105 = vst [vmem:[#allocation8 + $0x78] sm:$0xf] %v1041
    %1106 = vst [vmem:[#allocation8 + $0x7c] sm:$0xf] %v1042
    // Predicated region
    $region38: #{fp16_model_forward.1} parent=1 // pred_check
      _
    $region39: #{fp16_model_forward.1} parent=1 // pred_check_branch
      %1108 = sbr.rel (0) target = $region41
    $region40: #{fp16_model_forward.1} parent=1 // pred_region
      %s1110 = ssub.s32 2048, 2048
      %1111 = vsyncadd [#allocation4], %s1110
      %s1112 = sshll.u32 [#allocation8], 4
      %s1113 = int_to_ptr.vmem [resolvable:$true] %s1112
      %1118 = dma.vmem_to_hbm [thread:$0]  %s1113, 2048, %s6, [#allocation4], 64, 64, 4
    $region41: #{fp16_model_forward.1} parent=1 // pred_fallthru
      _
    // Predicated region
    $region42: #{fp16_model_forward.1} parent=1 // pred_check
      _
    $region43: #{fp16_model_forward.1} parent=1 // pred_check_branch
      %1120 = sbr.rel (0) target = $region45
    $region44: #{fp16_model_forward.1} parent=1 // pred_region
      %1121 = dma.done [#allocation4], 2048
    $region45: #{fp16_model_forward.1} parent=1 // pred_fallthru
      _
    %1122 = vsyncpa [#allocation3], 1
    %1123 = vsyncpa [#allocation6], 1
    %1124 = vsyncpa [#allocation4], 1

</llo_original>
